<compile_context>
chip_gen: v6e
topology: v6e:2x2x1
jax: 0.10.0
libtpu: 0.0.40
codegen_flags: <defaults>
</compile_context>

<pallas_src>
import numpy as np
import jax
import jax.numpy as jnp
from jax.experimental import pallas as pl
from jax.experimental.pallas import tpu as pltpu

EPS = 1e-5


def _round_up(x, m):
    return ((x + m - 1) // m) * m


def _cdiv(a, b):
    return (a + b - 1) // b


# ---------------------------------------------------------------------------
# Pallas kernel: fused (gathered-features) matmul + folded-BN bias + ReLU
# ---------------------------------------------------------------------------
def _matmul_bias_relu_kernel(g_ref, w_ref, b_ref, o_ref):
    acc = jnp.dot(g_ref[...], w_ref[...], preferred_element_type=jnp.float32)
    o_ref[...] = jnp.maximum(acc + b_ref[...], 0.0).astype(o_ref.dtype)


def fused_conv_bn_relu(G, Wf, bias, *, tn, out_dtype):
    """out = relu(G @ Wf + bias).

    G:    (Npad, Kc)  bf16 gathered neighbor features, Npad % tn == 0
    Wf:   (Kc, Cout)  bf16 BN-folded fused weights (VMEM-resident across the grid)
    bias: (1,  Cout)  f32  BN-folded bias           (VMEM-resident across the grid)
    """
    Npad, Kc = G.shape
    Cout = Wf.shape[1]
    assert Wf.shape[0] == Kc
    assert Npad % tn == 0 and tn % 16 == 0, (Npad, tn)   # bf16 sublane packing = 16
    return pl.pallas_call(
        _matmul_bias_relu_kernel,
        out_shape=jax.ShapeDtypeStruct((Npad, Cout), out_dtype),
        grid_spec=pltpu.PrefetchScalarGridSpec(
            num_scalar_prefetch=0,
            grid=(Npad // tn,),
            in_specs=[
                pl.BlockSpec((tn, Kc), lambda i: (i, 0)),     # gathered row tile
                pl.BlockSpec((Kc, Cout), lambda i: (0, 0)),   # fused weights, resident
                pl.BlockSpec((1, Cout), lambda i: (0, 0)),    # folded-BN bias, resident
            ],
            out_specs=pl.BlockSpec((tn, Cout), lambda i: (i, 0)),
        ),
        compiler_params=pltpu.CompilerParams(
            dimension_semantics=("parallel",),          # independent row tiles (megacore)
            vmem_limit_bytes=32 * 1024 * 1024),         # v7x-safe (64 MiB physical / TC)
    )(G, Wf, bias)


# ---------------------------------------------------------------------------
# Weight folding (BN -> conv) and gather-layout helpers
# ---------------------------------------------------------------------------
def _fold_bn(W, bn):
    gamma, beta, mean, var = bn
    scale = gamma * jax.lax.rsqrt(var + EPS)            # (1, Cout)
    return W * scale, beta - mean * scale


def _fold_and_fuse_weights(params):
    """BN-fold both convs + shortcut; fold K (and the shortcut) into the contraction dim."""
    W1, bn1, W2, bn2, Wd, bnd = params
    K, Cin, Cout = W1.shape
    W1f, b1 = _fold_bn(W1, bn1)
    W2f, b2 = _fold_bn(W2, bn2)
    Wdf, bd = _fold_bn(Wd, bnd)
    W1_fused = W1f.reshape(K * Cin, Cout).astype(jnp.bfloat16)            # (K*Cin, Cout)
    W2_fused = jnp.concatenate([W2f.reshape(K * Cout, Cout), Wdf],        # shortcut folded
                               axis=0).astype(jnp.bfloat16)               # (K*Cout+Cin, Cout)
    return W1_fused, b1.astype(jnp.float32), W2_fused, (b2 + bd).astype(jnp.float32)


def _prep_indices(nbr, n, npad):
    """Pad the kernel map to Npad rows up front; sentinel (>= n) -> zero row at index npad."""
    nbr = jnp.where(nbr >= n, npad, nbr).astype(jnp.int32)
    pad_rows = jnp.full((npad - n, nbr.shape[1]), npad, dtype=jnp.int32)
    return jnp.concatenate([nbr, pad_rows], axis=0)            # (npad, K)


def _pad_table(feat, npad):
    """bf16 gather table with npad+1 rows; row `npad` is the all-zero sentinel row."""
    feat = feat.astype(jnp.bfloat16)
    return jnp.pad(feat, ((0, npad + 1 - feat.shape[0]), (0, 0)))


def _pick_tile(n, tn, min_steps=8):
    """Row tile: multiple of 16 (bf16), as large as requested, but keep >= min_steps
    grid steps so the 'parallel' axis load-balances across TensorCores (v7x: 2 TCs)."""
    tn_eff = max(16, min(tn, _round_up(n, 16)))
    while tn_eff >= 32 and tn_eff % 32 == 0 and _cdiv(n, tn_eff) < min_steps:
        tn_eff //= 2
    return tn_eff, _round_up(n, tn_eff)


# ---------------------------------------------------------------------------
# ResidualBlock forward (two Pallas calls; shared path for the matched reference)
# ---------------------------------------------------------------------------
def _forward_impl(F, nbr, params, *, tn, use_pallas):
    N, Cin = F.shape
    K = nbr.shape[1]
    W1_fused, b1, W2_fused, b2 = _fold_and_fuse_weights(params)
    Cout = W1_fused.shape[1]

    tn_eff, Npad = _pick_tile(N, tn)
    idx = _prep_indices(nbr, N, Npad)          # (Npad, K) int32, values in [0, Npad]
    tbl_F = _pad_table(F, Npad)                # (Npad+1, Cin) bf16, zero row at Npad

    def mm(G, W, b, out_dtype):
        if use_pallas:
            return fused_conv_bn_relu(G, W, b, tn=tn_eff, out_dtype=out_dtype)
        return jax.nn.relu(jnp.dot(G, W, preferred_element_type=jnp.float32)
                           + b).astype(out_dtype)

    # conv1 + BN1 + ReLU (neighbor gather folded into the contraction dim).
    G1 = tbl_F[idx].reshape(Npad, K * Cin)                      # (Npad, K*Cin) bf16
    h = mm(G1, W1_fused, b1, jnp.bfloat16)                      # (Npad, Cout), stays padded

    # conv2 + BN2 + shortcut(1x1 conv + BN) + ReLU; shortcut folded as extra columns.
    # Pad rows of h (relu(b1) garbage) are never gathered: idx only holds real indices
    # (< N) or the zero sentinel row (== Npad).
    tbl_h = _pad_table(h, Npad)                                 # appends zero row at Npad
    G2 = jnp.concatenate([tbl_h[idx].reshape(Npad, K * Cout),
                          tbl_F[:Npad]], axis=1)                # (Npad, K*Cout + Cin) bf16
    out = mm(G2, W2_fused, b2, jnp.float32)
    return out[:N]


def residual_block_forward(F, nbr, params, *, tn=1024):
    """F: (N, Cin) f32 features; nbr: (N, 27) int32 kernel map (sentinel == N)."""
    return _forward_impl(F, nbr, params, tn=tn, use_pallas=True)


def reference_forward_matched(F, nbr, params, *, tn=1024):
    """Identical folded/bf16 math in plain JAX (validates Pallas tiling/indexing)."""
    return _forward_impl(F, nbr, params, tn=tn, use_pallas=False)


def reference_forward_f32(F, nbr_nk, params):
    """Pure-f32 module math (sparse conv + BN + ReLU, conv + BN, shortcut conv + BN, add, ReLU)."""
    W1, bn1, W2, bn2, Wd, bnd = params

    def sparse_conv(feat, W):
        pad = jnp.concatenate([feat, jnp.zeros((1, feat.shape[1]), feat.dtype)], axis=0)
        return jnp.einsum('nki,kio->no', pad[nbr_nk], W)

    def bn(x, p):
        g, b, m, v = p
        return (x - m) * jax.lax.rsqrt(v + EPS) * g + b

    h = jax.nn.relu(bn(sparse_conv(F, W1), bn1))
    main = bn(sparse_conv(h, W2), bn2)
    sc = bn(F @ Wd, bnd)
    return jax.nn.relu(main + sc)


# ---------------------------------------------------------------------------
# Deterministic setup
# ---------------------------------------------------------------------------
def build_neighbor_map(coords_np, offsets_np, n_points):
    lut = {tuple(c): i for i, c in enumerate(coords_np.tolist())}
    K = offsets_np.shape[0]
    nbr = np.full((n_points, K), n_points, dtype=np.int32)    # sentinel == n_points
    for k, off in enumerate(offsets_np.tolist()):
        for i, c in enumerate(coords_np.tolist()):
            nbr[i, k] = lut.get((c[0] + off[0], c[1] + off[1], c[2] + off[2]),
                                n_points)
    return nbr


def make_bn_params(key, c):
    k1, k2, k3, k4 = jax.random.split(key, 4)
    gamma = jax.random.uniform(k1, (1, c), minval=0.5, maxval=1.5)
    beta = 0.1 * jax.random.normal(k2, (1, c))
    mean = 0.1 * jax.random.normal(k3, (1, c))
    var = jax.random.uniform(k4, (1, c), minval=0.5, maxval=1.5)
    return (gamma.astype(jnp.float32), beta.astype(jnp.float32),
            mean.astype(jnp.float32), var.astype(jnp.float32))


if __name__ == "__main__":
    # ResidualBlock(inc=16, outc=32, ks=3, stride=1, dilation=1)
    # -> downsample branch is Conv3d(16, 32, ks=1) + BN (inc != outc).
    N, CIN, COUT, KS = 200, 16, 32, 3
    K = KS ** 3

    key = jax.random.PRNGKey(0)
    k_coord, k_feat, k_w1, k_w2, k_wd, k_bn1, k_bn2, k_bnd = jax.random.split(key, 8)

    # N distinct sparse voxel coordinates in an 8^3 grid.
    perm = np.asarray(jax.random.permutation(k_coord, 512))[:N]
    coords = np.stack([perm // 64, (perm // 8) % 8, perm % 8], axis=1).astype(np.int32)

    # 3x3x3 kernel offsets.
    offs = np.array([(dx, dy, dz)
                     for dx in (-1, 0, 1) for dy in (-1, 0, 1) for dz in (-1, 0, 1)],
                    dtype=np.int32)
    nbr = jnp.asarray(build_neighbor_map(coords, offs, N))                # (N, 27)

    F = jax.random.normal(k_feat, (N, CIN), dtype=jnp.float32)

    W1 = jax.random.normal(k_w1, (K, CIN, COUT), dtype=jnp.float32) / np.sqrt(K * CIN)
    W2 = jax.random.normal(k_w2, (K, COUT, COUT), dtype=jnp.float32) / np.sqrt(K * COUT)
    Wd = jax.random.normal(k_wd, (CIN, COUT), dtype=jnp.float32) / np.sqrt(CIN)
    bn1 = make_bn_params(k_bn1, COUT)
    bn2 = make_bn_params(k_bn2, COUT)
    bnd = make_bn_params(k_bnd, COUT)
    params = (W1, bn1, W2, bn2, Wd, bnd)

    # Small tn so the demo exercises a multi-step grid + ragged tail padding
    # (default tn=1024 is intended for real point-cloud sizes).
    fwd = jax.jit(lambda f, m, p: residual_block_forward(f, m, p, tn=64))
    out = jax.block_until_ready(fwd(F, nbr, params))

    ref_m = jax.block_until_ready(reference_forward_matched(F, nbr, params, tn=64))
    ref_f = jax.block_until_ready(reference_forward_f32(F, nbr, params))
    out_np = np.asarray(out)

    # Strict check vs identical-precision reference (validates Pallas tiling/indexing/padding).
    if not np.allclose(out_np, np.asarray(ref_m), rtol=1e-2, atol=1e-2):
        raise AssertionError("Pallas ResidualBlock mismatch vs matched-precision reference")
    # Loose check vs pure-f32 module math (bf16 matmul inputs -> looser tolerance).
    if not np.allclose(out_np, np.asarray(ref_f), rtol=1e-1, atol=1e-1):
        raise AssertionError("Pallas ResidualBlock mismatch vs f32 module reference")

    print("KERNEL_OK")
</pallas_src>

<mosaic_0001>
module attributes {stable_mosaic.version = 11 : i64} {
  func.func @_matmul_bias_relu_kernel(%arg0: i32, %arg1: memref<16x432xbf16, #tpu.memory_space<vmem>>, %arg2: memref<432x32xbf16, #tpu.memory_space<vmem>>, %arg3: memref<1x32xf32, #tpu.memory_space<vmem>>, %arg4: memref<16x32xbf16, #tpu.memory_space<vmem>>) attributes {dimension_semantics = [#tpu.dimension_semantics<parallel>], iteration_bounds = array<i64: 13>, scalar_prefetch = 0 : i64, scratch_operands = 0 : i64, tpu.core_type = #tpu.core_type<tc>, window_params = [{transform_indices = @transform_0, window_bounds = array<i64: 16, 432>}, {pipeline_mode = #tpu.pipeline_mode<synchronous>, transform_indices = @transform_1, window_bounds = array<i64: 432, 32>}, {pipeline_mode = #tpu.pipeline_mode<synchronous>, transform_indices = @transform_2, window_bounds = array<i64: 1, 32>}, {transform_indices = @transform_3, window_bounds = array<i64: 16, 32>}]} {
    %c0 = arith.constant 0 : index
    %c0_0 = arith.constant 0 : index
    %0 = vector.load %arg1[%c0, %c0_0] : memref<16x432xbf16, #tpu.memory_space<vmem>>, vector<16x432xbf16>
    %c0_1 = arith.constant 0 : index
    %c0_2 = arith.constant 0 : index
    %1 = vector.load %arg2[%c0_1, %c0_2] : memref<432x32xbf16, #tpu.memory_space<vmem>>, vector<432x32xbf16>
    %cst = arith.constant dense<0.000000e+00> : vector<16x32xf32>
    %2 = tpu.matmul %0, %1, %cst {dimension_numbers = #tpu.dot_dimension_numbers<[1], [0], [0], [1], [0, 0, 1, 1], [], []>} : vector<16x432xbf16>, vector<432x32xbf16>, vector<16x32xf32> -> vector<16x32xf32>
    %c0_3 = arith.constant 0 : index
    %c0_4 = arith.constant 0 : index
    %3 = vector.load %arg3[%c0_3, %c0_4] : memref<1x32xf32, #tpu.memory_space<vmem>>, vector<1x32xf32>
    %4 = vector.broadcast %3 : vector<1x32xf32> to vector<16x32xf32>
    %5 = arith.addf %2, %4 : vector<16x32xf32>
    %cst_5 = arith.constant 0.000000e+00 : f32
    %6 = vector.broadcast %cst_5 : f32 to vector<16x32xf32>
    %7 = arith.maximumf %5, %6 : vector<16x32xf32>
    %8 = arith.truncf %7 : vector<16x32xf32> to vector<16x32xbf16>
    %c0_6 = arith.constant 0 : index
    %c0_7 = arith.constant 0 : index
    %9 = vector.load %arg4[%c0_6, %c0_7] : memref<16x32xbf16, #tpu.memory_space<vmem>>, vector<16x32xbf16>
    tpu.vector_store %arg4[%c0_6, %c0_7], %8 {strides = array<i32>} : memref<16x32xbf16, #tpu.memory_space<vmem>>, vector<16x32xbf16>,
    return
  }
  func.func @transform_0(%arg0: i32) -> (i32, i32) {
    %c0_i32 = arith.constant 0 : i32
    %c0_i32_0 = arith.constant 0 : i32
    return %arg0, %c0_i32 : i32, i32
  }
  func.func @transform_1(%arg0: i32) -> (i32, i32) {
    %c0_i32 = arith.constant 0 : i32
    %c0_i32_0 = arith.constant 0 : i32
    %c0_i32_1 = arith.constant 0 : i32
    return %c0_i32, %c0_i32_0 : i32, i32
  }
  func.func @transform_2(%arg0: i32) -> (i32, i32) {
    %c0_i32 = arith.constant 0 : i32
    %c0_i32_0 = arith.constant 0 : i32
    %c0_i32_1 = arith.constant 0 : i32
    return %c0_i32, %c0_i32_0 : i32, i32
  }
  func.func @transform_3(%arg0: i32) -> (i32, i32) {
    %c0_i32 = arith.constant 0 : i32
    %c0_i32_0 = arith.constant 0 : i32
    return %arg0, %c0_i32 : i32, i32
  }
}

module attributes {stable_mosaic.version = 11 : i64} {
  func.func @_matmul_bias_relu_kernel(%arg0: i32, %arg1: memref<16x880xbf16, #tpu.memory_space<vmem>>, %arg2: memref<880x32xbf16, #tpu.memory_space<vmem>>, %arg3: memref<1x32xf32, #tpu.memory_space<vmem>>, %arg4: memref<16x32xf32, #tpu.memory_space<vmem>>) attributes {dimension_semantics = [#tpu.dimension_semantics<parallel>], iteration_bounds = array<i64: 13>, scalar_prefetch = 0 : i64, scratch_operands = 0 : i64, tpu.core_type = #tpu.core_type<tc>, window_params = [{transform_indices = @transform_0, window_bounds = array<i64: 16, 880>}, {pipeline_mode = #tpu.pipeline_mode<synchronous>, transform_indices = @transform_1, window_bounds = array<i64: 880, 32>}, {pipeline_mode = #tpu.pipeline_mode<synchronous>, transform_indices = @transform_2, window_bounds = array<i64: 1, 32>}, {transform_indices = @transform_3, window_bounds = array<i64: 16, 32>}]} {
    %c0 = arith.constant 0 : index
    %c0_0 = arith.constant 0 : index
    %0 = vector.load %arg1[%c0, %c0_0] : memref<16x880xbf16, #tpu.memory_space<vmem>>, vector<16x880xbf16>
    %c0_1 = arith.constant 0 : index
    %c0_2 = arith.constant 0 : index
    %1 = vector.load %arg2[%c0_1, %c0_2] : memref<880x32xbf16, #tpu.memory_space<vmem>>, vector<880x32xbf16>
    %cst = arith.constant dense<0.000000e+00> : vector<16x32xf32>
    %2 = tpu.matmul %0, %1, %cst {dimension_numbers = #tpu.dot_dimension_numbers<[1], [0], [0], [1], [0, 0, 1, 1], [], []>} : vector<16x880xbf16>, vector<880x32xbf16>, vector<16x32xf32> -> vector<16x32xf32>
    %c0_3 = arith.constant 0 : index
    %c0_4 = arith.constant 0 : index
    %3 = vector.load %arg3[%c0_3, %c0_4] : memref<1x32xf32, #tpu.memory_space<vmem>>, vector<1x32xf32>
    %4 = vector.broadcast %3 : vector<1x32xf32> to vector<16x32xf32>
    %5 = arith.addf %2, %4 : vector<16x32xf32>
    %cst_5 = arith.constant 0.000000e+00 : f32
    %6 = vector.broadcast %cst_5 : f32 to vector<16x32xf32>
    %7 = arith.maximumf %5, %6 : vector<16x32xf32>
    %c0_6 = arith.constant 0 : index
    %c0_7 = arith.constant 0 : index
    %8 = vector.load %arg4[%c0_6, %c0_7] : memref<16x32xf32, #tpu.memory_space<vmem>>, vector<16x32xf32>
    tpu.vector_store %arg4[%c0_6, %c0_7], %7 {strides = array<i32>} : memref<16x32xf32, #tpu.memory_space<vmem>>, vector<16x32xf32>,
    return
  }
  func.func @transform_0(%arg0: i32) -> (i32, i32) {
    %c0_i32 = arith.constant 0 : i32
    %c0_i32_0 = arith.constant 0 : i32
    return %arg0, %c0_i32 : i32, i32
  }
  func.func @transform_1(%arg0: i32) -> (i32, i32) {
    %c0_i32 = arith.constant 0 : i32
    %c0_i32_0 = arith.constant 0 : i32
    %c0_i32_1 = arith.constant 0 : i32
    return %c0_i32, %c0_i32_0 : i32, i32
  }
  func.func @transform_2(%arg0: i32) -> (i32, i32) {
    %c0_i32 = arith.constant 0 : i32
    %c0_i32_0 = arith.constant 0 : i32
    %c0_i32_1 = arith.constant 0 : i32
    return %c0_i32, %c0_i32_0 : i32, i32
  }
  func.func @transform_3(%arg0: i32) -> (i32, i32) {
    %c0_i32 = arith.constant 0 : i32
    %c0_i32_0 = arith.constant 0 : i32
    return %arg0, %c0_i32 : i32, i32
  }
}

</mosaic_0001>

<llo_original>
// kernel: _lambda_.2
$region0: #{_lambda_.2}
  #allocation0 [shape = 'u32[]', space=smem, size = 0x4, offset = 0x4, fixed_abs, tag = 'smem constant byte address 0x4 - core index']
  #allocation1 [shape = 'u32[144,128]{1,0:T(1,128)}', space=vmem, size = 0x12000, scoped, tag = 'internal scratch']
  %s0 = inlined_call_operand.vmem [shape: bf16[208,432], index: 0, kind: input, shape index: {}]
  %s1 = inlined_call_operand.vmem [shape: bf16[432,32], index: 1, kind: input, shape index: {}]
  %s2 = inlined_call_operand.vmem [shape: f32[1,32], index: 2, kind: input, shape index: {}]
  %s3 = inlined_call_operand.vmem [shape: bf16[208,32], index: 3, kind: output, shape index: {}]
  %s4 = sld [smem:[#allocation0]]
  $region45: #{_lambda_.2} parent=0
    _
  %s6 = ssub.s32 1, %s4
  %s7 = scalar_select 0, %s6, %s4
  loop: start=0, step=1, limit=15
  $region2: #{_lambda_.2} parent=0 // loop_pre_header
    _
  $region3: #{_lambda_.2} parent=0 // loop_header
    %s9 = sphi 0, %s13
    %p10 = scmp.ge.s32.totalorder %s9, 15
    %s19 = sphi 0, %s21
    %s22 = sphi 0, %s19
    %s23 = sphi 0, %s22
    %s39 = sphi 0, %s23
    %s43 = sphi 0, %s43
    %s45 = sphi 0, %s43
    %s46 = sphi 0, %s45
    %s60 = sphi 0, %s46
    %s64 = sphi 0, %s64
    %s66 = sphi 0, %s64
    %s67 = sphi 0, %s66
    %s81 = sphi 0, %s67
    %s87 = sphi 0, %s89
    %s90 = sphi 0, %s87
    %s91 = sphi 0, %s90
    %s107 = sphi 0, %s91
  $region4: #{_lambda_.2} parent=0 // loop_header_branch
    %12 = sbr.rel (%p10) target = $region8
  $region5: #{_lambda_.2} parent=0 // loop_body
    %s14 = ssub.s32 %s9, 1
    %s15 = ssub.s32 %s9, 2
    %s16 = sadd.s32 %s9, 1
    %s17 = ssub.s32 %s9, %s16
    %p18 = scmp.eq.s32.totalorder %s17, 0
    %s20 = sadd.s32 %s19, 1
    %s21 = scalar_select %p18, %s19, %s20
    %p24 = pneg %p18
    %p25 = scmp.eq.s32.totalorder %s9, 12
    %p26 = por %p24, %p25
    %p27 = scmp.ne.s32.totalorder %s19, %s22
    %p28 = scmp.eq.s32.totalorder %s9, 0
    %p29 = por %p27, %p28
    %p30 = scmp.ne.s32.totalorder %s19, %s22
    %p31 = scmp.eq.s32.totalorder %s14, 12
    %p32 = por %p30, %p31
    %p33 = scmp.ne.s32.totalorder %s22, %s23
    %p34 = scmp.eq.s32.totalorder %s14, 0
    %p35 = por %p33, %p34
    %p36 = scmp.ne.s32.totalorder %s22, %s23
    %p37 = scmp.eq.s32.totalorder %s15, 12
    %p38 = por %p36, %p37
    %p40 = scmp.ne.s32.totalorder %s23, %s39
    %p41 = scmp.eq.s32.totalorder %s15, 0
    %p42 = por %p40, %p41
    %s44 = sadd.s32 %s43, 1
    %p47 = scmp.eq.s32.totalorder %s9, 12
    %p48 = scmp.ne.s32.totalorder %s43, %s45
    %p49 = scmp.eq.s32.totalorder %s9, 0
    %p50 = por %p48, %p49
    %p51 = scmp.ne.s32.totalorder %s43, %s45
    %p52 = scmp.eq.s32.totalorder %s14, 12
    %p53 = por %p51, %p52
    %p54 = scmp.ne.s32.totalorder %s45, %s46
    %p55 = scmp.eq.s32.totalorder %s14, 0
    %p56 = por %p54, %p55
    %p57 = scmp.ne.s32.totalorder %s45, %s46
    %p58 = scmp.eq.s32.totalorder %s15, 12
    %p59 = por %p57, %p58
    %p61 = scmp.ne.s32.totalorder %s46, %s60
    %p62 = scmp.eq.s32.totalorder %s15, 0
    %p63 = por %p61, %p62
    %s65 = sadd.s32 %s64, 1
    %p68 = scmp.eq.s32.totalorder %s9, 12
    %p69 = scmp.ne.s32.totalorder %s64, %s66
    %p70 = scmp.eq.s32.totalorder %s9, 0
    %p71 = por %p69, %p70
    %p72 = scmp.ne.s32.totalorder %s64, %s66
    %p73 = scmp.eq.s32.totalorder %s14, 12
    %p74 = por %p72, %p73
    %p75 = scmp.ne.s32.totalorder %s66, %s67
    %p76 = scmp.eq.s32.totalorder %s14, 0
    %p77 = por %p75, %p76
    %p78 = scmp.ne.s32.totalorder %s66, %s67
    %p79 = scmp.eq.s32.totalorder %s15, 12
    %p80 = por %p78, %p79
    %p82 = scmp.ne.s32.totalorder %s67, %s81
    %p83 = scmp.eq.s32.totalorder %s15, 0
    %p84 = por %p82, %p83
    %s85 = ssub.s32 %s9, %s16
    %p86 = scmp.eq.s32.totalorder %s85, 0
    %s88 = sadd.s32 %s87, 1
    %s89 = scalar_select %p86, %s87, %s88
    %p92 = pneg %p86
    %p93 = scmp.eq.s32.totalorder %s9, 12
    %p94 = por %p92, %p93
    %p95 = scmp.ne.s32.totalorder %s87, %s90
    %p96 = scmp.eq.s32.totalorder %s9, 0
    %p97 = por %p95, %p96
    %p98 = scmp.ne.s32.totalorder %s87, %s90
    %p99 = scmp.eq.s32.totalorder %s14, 12
    %p100 = por %p98, %p99
    %p101 = scmp.ne.s32.totalorder %s90, %s91
    %p102 = scmp.eq.s32.totalorder %s14, 0
    %p103 = por %p101, %p102
    %p104 = scmp.ne.s32.totalorder %s90, %s91
    %p105 = scmp.eq.s32.totalorder %s15, 12
    %p106 = por %p104, %p105
    %p108 = scmp.ne.s32.totalorder %s91, %s107
    %p109 = scmp.eq.s32.totalorder %s15, 0
    %p110 = por %p108, %p109
    %p111 = scmp.le.s32.totalorder 1, %s9
    %p112 = scmp.lt.s32.totalorder %s9, 14
    %p113 = pnand %p111, %p112
    %p114 = pneg %p113
    // Predicated region
    $region9: #{_lambda_.2} parent=5 // pred_check
      _
    $region10: #{_lambda_.2} parent=5 // pred_check_branch
      %116 = sbr.rel (%p113) target = $region12
    $region11: #{_lambda_.2} parent=5 // pred_region
      %s117 = ssub.s32 %s9, 1
      // Predicated region
      $region13: #{_lambda_.2} parent=11 // pred_check
        %p118 = pneg %p56
      $region14: #{_lambda_.2} parent=11 // pred_check_branch
        %120 = sbr.rel (%p118) target = $region16
      $region15: #{_lambda_.2} parent=11 // pred_region
        _
      $region16: #{_lambda_.2} parent=11 // pred_fallthru
        _
      // Predicated region
      $region17: #{_lambda_.2} parent=11 // pred_check
        %p121 = pneg %p77
      $region18: #{_lambda_.2} parent=11 // pred_check_branch
        %123 = sbr.rel (%p121) target = $region20
      $region19: #{_lambda_.2} parent=11 // pred_region
        _
      $region20: #{_lambda_.2} parent=11 // pred_fallthru
        _
    $region12: #{_lambda_.2} parent=5 // pred_fallthru
      _
    %p124 = scmp.lt.s32.totalorder %s9, 13
    // Predicated region
    $region21: #{_lambda_.2} parent=5 // pred_check
      %p125 = pneg %p124
    $region22: #{_lambda_.2} parent=5 // pred_check_branch
      %127 = sbr.rel (%p125) target = $region24
    $region23: #{_lambda_.2} parent=5 // pred_region
      // Predicated region
      $region25: #{_lambda_.2} parent=23 // pred_check
        %p128 = pneg %p29
      $region26: #{_lambda_.2} parent=23 // pred_check_branch
        %130 = sbr.rel (%p128) target = $region28
      $region27: #{_lambda_.2} parent=23 // pred_region
        %s131 = smul.u32 2, %s9
        %p132 = scmp.lt.s32.totalorder %s131, 25
        %s133 = scalar_select %p132, %s131, 25
        %s134 = smul.addr %s133, 4
        %s135 = smul.addr %s134, 4
        %s136 = scalar_lea.vmem %s0, %s135
        %s137 = smul.u32 2, %s9
      $region28: #{_lambda_.2} parent=23 // pred_fallthru
        _
    $region24: #{_lambda_.2} parent=5 // pred_fallthru
      _
    %p138 = scmp.le.s32.totalorder 1, %s9
    %p139 = scmp.lt.s32.totalorder %s9, 14
    %p140 = pnand %p138, %p139
    %p141 = pneg %p140
    // Predicated region
    $region29: #{_lambda_.2} parent=5 // pred_check
      _
    $region30: #{_lambda_.2} parent=5 // pred_check_branch
      %143 = sbr.rel (%p140) target = $region32
    $region31: #{_lambda_.2} parent=5 // pred_region
      %s144 = ssub.s32 %s9, 1
      %s145 = smul.u32 2, %s14
      %p146 = scmp.lt.s32.totalorder %s145, 25
      %s147 = scalar_select %p146, %s145, 25
      %s148 = smul.addr %s147, 4
      %s149 = smul.addr %s148, 4
      %s150 = scalar_lea.vmem %s0, %s149
      %p151 = pneg %p35
      %p152 = pneg %p32
      %p153 = pneg %p56
      %p154 = pneg %p53
      %p155 = pneg %p77
      %p156 = pneg %p74
      %p157 = pneg %p103
      %p158 = pneg %p100
      %s159 = smul.u32 2, %s14
      %p160 = scmp.lt.s32.totalorder %s159, 25
      %s161 = scalar_select %p160, %s159, 25
      %s162 = smul.addr %s161, 4
      %s163 = scalar_lea.vmem %s3, %s162
      %s164 = smul.u32 2, %s14
      %p165 = scmp.lt.s32.totalorder %s164, 25
      %s166 = scalar_select %p165, %s164, 25
      %s167 = smul.addr %s166, 4
      %s168 = smul.addr %s167, 4
      %s169 = scalar_lea.vmem %s0, %s168
      %s170 = smul.u32 2, %s14
      %s171 = smul.u32 2, %s14
      %p172 = scmp.lt.s32.totalorder %s171, 25
      %s173 = scalar_select %p172, %s171, 25
      %s174 = smul.addr %s173, 4
      %s175 = scalar_lea.vmem %s3, %s174
      %s176 = smul.u32 2, %s14
      %v178 = vld [vmem:[%s169] sm:$0xff]
      %v179 = vld [vmem:[%s169 + $0x8] sm:$0xff]
      %v180 = vld [vmem:[%s169 + $0x10] sm:$0xff]
      %v181 = vld [vmem:[%s169 + $0x18] sm:$0xff]
      %v182 = vld [vmem:[%s1] sm:$0xf]
      %v183 = vld [vmem:[%s1 + $0x4] sm:$0xf]
      %v184 = vld [vmem:[%s1 + $0x8] sm:$0xf]
      %v185 = vld [vmem:[%s1 + $0xc] sm:$0xf]
      %v186 = vld [vmem:[%s1 + $0x10] sm:$0xf]
      %v187 = vld [vmem:[%s1 + $0x14] sm:$0xf]
      %v188 = vld [vmem:[%s1 + $0x18] sm:$0xf]
      %v189 = vld [vmem:[%s1 + $0x1c] sm:$0xf]
      %v190 = vld [vmem:[%s1 + $0x20] sm:$0xf]
      %v191 = vld [vmem:[%s1 + $0x24] sm:$0xf]
      %v192 = vld [vmem:[%s1 + $0x28] sm:$0xf]
      %v193 = vld [vmem:[%s1 + $0x2c] sm:$0xf]
      %v194 = vld [vmem:[%s1 + $0x30] sm:$0xf]
      %v195 = vld [vmem:[%s1 + $0x34] sm:$0xf]
      %v196 = vld [vmem:[%s1 + $0x38] sm:$0xf]
      %v197 = vld [vmem:[%s1 + $0x3c] sm:$0xf]
      %v198 = vld [vmem:[%s1 + $0x40] sm:$0xf]
      %v199 = vld [vmem:[%s1 + $0x44] sm:$0xf]
      %v200 = vld [vmem:[%s1 + $0x48] sm:$0xf]
      %v201 = vld [vmem:[%s1 + $0x4c] sm:$0xf]
      %v202 = vld [vmem:[%s1 + $0x50] sm:$0xf]
      %v203 = vld [vmem:[%s1 + $0x54] sm:$0xf]
      %v204 = vld [vmem:[%s1 + $0x58] sm:$0xf]
      %v205 = vld [vmem:[%s1 + $0x5c] sm:$0xf]
      %v206 = vld [vmem:[%s1 + $0x60] sm:$0xf]
      %v207 = vld [vmem:[%s1 + $0x64] sm:$0xf]
      %v208 = vld [vmem:[%s1 + $0x68] sm:$0xf]
      %v209 = vld [vmem:[%s1 + $0x6c] sm:$0xf]
      %v210 = vld [vmem:[%s1 + $0x70] sm:$0xf]
      %v211 = vld [vmem:[%s1 + $0x74] sm:$0xf]
      %v212 = vld [vmem:[%s1 + $0x78] sm:$0xf]
      %v213 = vld [vmem:[%s1 + $0x7c] sm:$0xf]
      %v214 = vld [vmem:[%s1 + $0x80] sm:$0xf]
      %v215 = vld [vmem:[%s1 + $0x84] sm:$0xf]
      %v216 = vld [vmem:[%s1 + $0x88] sm:$0xf]
      %v217 = vld [vmem:[%s1 + $0x8c] sm:$0xf]
      %v218 = vld [vmem:[%s1 + $0x90] sm:$0xf]
      %v219 = vld [vmem:[%s1 + $0x94] sm:$0xf]
      %v220 = vld [vmem:[%s1 + $0x98] sm:$0xf]
      %v221 = vld [vmem:[%s1 + $0x9c] sm:$0xf]
      %v222 = vld [vmem:[%s1 + $0xa0] sm:$0xf]
      %v223 = vld [vmem:[%s1 + $0xa4] sm:$0xf]
      %v224 = vld [vmem:[%s1 + $0xa8] sm:$0xf]
      %v225 = vld [vmem:[%s1 + $0xac] sm:$0xf]
      %v226 = vld [vmem:[%s1 + $0xb0] sm:$0xf]
      %v227 = vld [vmem:[%s1 + $0xb4] sm:$0xf]
      %v228 = vld [vmem:[%s1 + $0xb8] sm:$0xf]
      %v229 = vld [vmem:[%s1 + $0xbc] sm:$0xf]
      %v230 = vld [vmem:[%s1 + $0xc0] sm:$0xf]
      %v231 = vld [vmem:[%s1 + $0xc4] sm:$0xf]
      %v232 = vld [vmem:[%s1 + $0xc8] sm:$0xf]
      %v233 = vld [vmem:[%s1 + $0xcc] sm:$0xf]
      %v234 = vld [vmem:[%s1 + $0xd0] sm:$0xf]
      %v235 = vld [vmem:[%s1 + $0xd4] sm:$0xf]
      %v236 = vld [vmem:[%s2] sm:$0x1]
      %v238 = vlaneseq
      %v239 = vshrl.u32 %v238, 7
      %v240 = vsub.s32 0, %v239
      %v241 = vrot.slane %v236, %v240
      %v247 = vunpack.c.l.b16 %v178
      %v248 = vunpack.c.h.b16 %v178
      %v249 = vunpack.c.l.b16 %v179
      %v250 = vunpack.c.h.b16 %v179
      %v251 = vunpack.c.l.b16 %v180
      %v252 = vunpack.c.h.b16 %v180
      %v253 = vunpack.c.l.b16 %v181
      %v254 = vunpack.c.h.b16 %v181
      %v255 = vpack.c.b16 %v251, %v247
      %v256 = vpack.c.b16 %v252, %v248
      %v257 = vpack.c.b16 %v253, %v249
      %v258 = vpack.c.b16 %v254, %v250
      %v316 = vunpack.c.l.b16 %v182
      %v317 = vunpack.c.l.b16 %v183
      %v318 = vunpack.c.l.b16 %v184
      %v319 = vunpack.c.l.b16 %v185
      %v320 = vunpack.c.l.b16 %v186
      %v321 = vunpack.c.l.b16 %v187
      %v322 = vunpack.c.l.b16 %v188
      %v323 = vunpack.c.l.b16 %v189
      %v324 = vunpack.c.l.b16 %v190
      %v325 = vunpack.c.l.b16 %v191
      %v326 = vunpack.c.l.b16 %v192
      %v327 = vunpack.c.l.b16 %v193
      %v328 = vunpack.c.l.b16 %v194
      %v329 = vunpack.c.l.b16 %v195
      %v330 = vunpack.c.l.b16 %v196
      %v331 = vunpack.c.l.b16 %v197
      %v332 = vunpack.c.l.b16 %v198
      %v333 = vunpack.c.l.b16 %v199
      %v334 = vunpack.c.l.b16 %v200
      %v335 = vunpack.c.l.b16 %v201
      %v336 = vunpack.c.l.b16 %v202
      %v337 = vunpack.c.l.b16 %v203
      %v338 = vunpack.c.l.b16 %v204
      %v339 = vunpack.c.l.b16 %v205
      %v340 = vunpack.c.l.b16 %v206
      %v341 = vunpack.c.l.b16 %v207
      %v342 = vunpack.c.l.b16 %v208
      %v343 = vunpack.c.l.b16 %v209
      %v344 = vunpack.c.l.b16 %v210
      %v345 = vunpack.c.l.b16 %v211
      %v346 = vunpack.c.l.b16 %v212
      %v347 = vunpack.c.l.b16 %v213
      %v348 = vunpack.c.l.b16 %v214
      %v349 = vunpack.c.l.b16 %v215
      %v350 = vunpack.c.l.b16 %v216
      %v351 = vunpack.c.l.b16 %v217
      %v352 = vunpack.c.l.b16 %v218
      %v353 = vunpack.c.l.b16 %v219
      %v354 = vunpack.c.l.b16 %v220
      %v355 = vunpack.c.l.b16 %v221
      %v356 = vunpack.c.l.b16 %v222
      %v357 = vunpack.c.l.b16 %v223
      %v358 = vunpack.c.l.b16 %v224
      %v359 = vunpack.c.l.b16 %v225
      %v360 = vunpack.c.l.b16 %v226
      %v361 = vunpack.c.l.b16 %v227
      %v362 = vunpack.c.l.b16 %v228
      %v363 = vunpack.c.l.b16 %v229
      %v364 = vunpack.c.l.b16 %v230
      %v365 = vunpack.c.l.b16 %v231
      %v366 = vunpack.c.l.b16 %v232
      %v367 = vunpack.c.l.b16 %v233
      %v368 = vunpack.c.l.b16 %v234
      %v369 = vunpack.c.l.b16 %v235
      %v370 = vpack.c.b16 %v317, %v316
      %v371 = vpack.c.b16 %v319, %v318
      %v372 = vpack.c.b16 %v321, %v320
      %v373 = vpack.c.b16 %v323, %v322
      %v374 = vpack.c.b16 %v325, %v324
      %v375 = vpack.c.b16 %v327, %v326
      %v376 = vpack.c.b16 %v329, %v328
      %v377 = vpack.c.b16 %v331, %v330
      %v378 = vpack.c.b16 %v333, %v332
      %v379 = vpack.c.b16 %v335, %v334
      %v380 = vpack.c.b16 %v337, %v336
      %v381 = vpack.c.b16 %v339, %v338
      %v382 = vpack.c.b16 %v341, %v340
      %v383 = vpack.c.b16 %v343, %v342
      %v384 = vpack.c.b16 %v345, %v344
      %v385 = vpack.c.b16 %v347, %v346
      %v386 = vpack.c.b16 %v349, %v348
      %v387 = vpack.c.b16 %v351, %v350
      %v388 = vpack.c.b16 %v353, %v352
      %v389 = vpack.c.b16 %v355, %v354
      %v390 = vpack.c.b16 %v357, %v356
      %v391 = vpack.c.b16 %v359, %v358
      %v392 = vpack.c.b16 %v361, %v360
      %v393 = vpack.c.b16 %v363, %v362
      %v394 = vpack.c.b16 %v365, %v364
      %v395 = vpack.c.b16 %v367, %v366
      %v396 = vpack.c.b16 %v369, %v368
      %vm424 = vcmask 392192
      %v426 = vsel %vm424, %v258, 0
      %428 = vmatprep.subr.bf16.mxu0 0
      %429 = vmatpush1.bf16.msra.mxu0 %v377
      %430 = vmatprep.subr.bf16.mxu0 0
      %431 = vmatpush1.bf16.msra.mxu0 %v376
      %432 = vmatprep.subr.bf16.mxu0 0
      %433 = vmatpush1.bf16.msra.mxu0 %v375
      %434 = vmatprep.subr.bf16.mxu0 0
      %435 = vmatpush1.bf16.msra.mxu0 %v374
      %436 = vmatprep.subr.bf16.mxu0 0
      %437 = vmatpush1.bf16.msra.mxu0 %v373
      %438 = vmatprep.subr.bf16.mxu0 0
      %439 = vmatpush1.bf16.msra.mxu0 %v372
      %440 = vmatprep.subr.bf16.mxu0 0
      %441 = vmatpush1.bf16.msra.mxu0 %v371
      %442 = vmatprep.subr.bf16.mxu0 0
      %443 = vmatpush1.bf16.msra.mxu0 %v370
      %444 = vmatprep.subr.bf16.mxu0 0
      %445 = vmatpush2.bf16.msra.mxu0 %v385
      %446 = vmatprep.subr.bf16.mxu0 0
      %447 = vmatpush2.bf16.msra.mxu0 %v384
      %448 = vmatprep.subr.bf16.mxu0 0
      %449 = vmatpush2.bf16.msra.mxu0 %v383
      %450 = vmatprep.subr.bf16.mxu0 0
      %451 = vmatpush2.bf16.msra.mxu0 %v382
      %452 = vmatprep.subr.bf16.mxu0 0
      %453 = vmatpush2.bf16.msra.mxu0 %v381
      %454 = vmatprep.subr.bf16.mxu0 0
      %455 = vmatpush2.bf16.msra.mxu0 %v380
      %456 = vmatprep.subr.bf16.mxu0 0
      %457 = vmatpush2.bf16.msra.mxu0 %v379
      %458 = vmatprep.subr.bf16.mxu0 0
      %459 = vmatpush2.bf16.msra.mxu0 %v378
      %460 = vmatprep.mubr.bf16.mxu0 %v256
      %461 = vmatmul.mubr.bf16.gmra.mxu0 %v255
      %v462 = vpop.f32.mrf.mxu0
      %v463 = vadd.f32 %v241, %v462
      %v464 = vpop.f32.mrf.mxu0
      %v465 = vpop.f32.mrf.mxu0
      %v466 = vadd.f32 %v241, %v465
      %v467 = vpop.f32.mrf.mxu0
      %468 = vdwg.mxu0
      %469 = vmatprep.subr.bf16.mxu0 0
      %470 = vmatpush1.bf16.msra.mxu0 %v393
      %471 = vmatprep.subr.bf16.mxu0 0
      %472 = vmatpush1.bf16.msra.mxu0 %v392
      %473 = vmatprep.subr.bf16.mxu0 0
      %474 = vmatpush1.bf16.msra.mxu0 %v391
      %475 = vmatprep.subr.bf16.mxu0 0
      %476 = vmatpush1.bf16.msra.mxu0 %v390
      %477 = vmatprep.subr.bf16.mxu0 0
      %478 = vmatpush1.bf16.msra.mxu0 %v389
      %479 = vmatprep.subr.bf16.mxu0 0
      %480 = vmatpush1.bf16.msra.mxu0 %v388
      %481 = vmatprep.subr.bf16.mxu0 0
      %482 = vmatpush1.bf16.msra.mxu0 %v387
      %483 = vmatprep.subr.bf16.mxu0 0
      %484 = vmatpush1.bf16.msra.mxu0 %v386
      %485 = vmatprep.subr.bf16.mxu0 0
      %486 = vmatpush2.bf16.msra.mxu0 0
      %487 = vmatprep.subr.bf16.mxu0 0
      %488 = vmatpush2.bf16.msra.mxu0 0
      %489 = vmatprep.subr.bf16.mxu0 0
      %490 = vmatpush2.bf16.msra.mxu0 0
      %491 = vmatprep.subr.bf16.mxu0 0
      %492 = vmatpush2.bf16.msra.mxu0 0
      %493 = vmatprep.subr.bf16.mxu0 0
      %494 = vmatpush2.bf16.msra.mxu0 0
      %495 = vmatprep.subr.bf16.mxu0 0
      %496 = vmatpush2.bf16.msra.mxu0 %v396
      %497 = vmatprep.subr.bf16.mxu0 0
      %498 = vmatpush2.bf16.msra.mxu0 %v395
      %499 = vmatprep.subr.bf16.mxu0 0
      %500 = vmatpush2.bf16.msra.mxu0 %v394
      %501 = vmatprep.mubr.bf16.mxu0 %v426
      %502 = vmatmul.mubr.bf16.gmra.mxu0 %v257
      %v503 = vpop.f32.mrf.mxu0
      %v504 = vadd.f32 %v463, %v503
      %v505 = vpop.f32.mrf.mxu0
      %v506 = vpop.f32.mrf.mxu0
      %v507 = vadd.f32 %v466, %v506
      %v508 = vpop.f32.mrf.mxu0
      %509 = vdwg.mxu0
      %v510 = vmax.f32 %v504, 0.0
      %v511 = vmax.f32 %v507, 0.0
      %v512 = vpack.c.bf16 %v511, %v510
      %v514 = vunpack.c.l.b16 %v512
      %v515 = vunpack.c.h.b16 %v512
      %v516 = vpack.c.b16 %v514, %v514
      %v517 = vpack.c.b16 %v515, %v515
      %vm520 = vcmask 257024
      %521 = vst.msk [vmem:[%s175] sm:$0xf] %vm520, %v516
      %522 = vst.msk [vmem:[%s175 + $0x4] sm:$0xf] %vm520, %v517
      %s523 = smul.u32 2, %s14
      %p524 = scmp.lt.s32.totalorder %s523, 25
      %s525 = scalar_select %p524, %s523, 25
      %s526 = smul.addr %s525, 4
      %s527 = scalar_lea.vmem %s3, %s526
      // Predicated region
      $region33: #{_lambda_.2} parent=31 // pred_check
        %p528 = pneg %p100
      $region34: #{_lambda_.2} parent=31 // pred_check_branch
        %530 = sbr.rel (%p528) target = $region36
      $region35: #{_lambda_.2} parent=31 // pred_region
        %s531 = smul.u32 2, %s14
      $region36: #{_lambda_.2} parent=31 // pred_fallthru
        _
    $region32: #{_lambda_.2} parent=5 // pred_fallthru
      _
    %p532 = scmp.le.s32.totalorder 2, %s9
    // Predicated region
    $region37: #{_lambda_.2} parent=5 // pred_check
      %p533 = pneg %p532
    $region38: #{_lambda_.2} parent=5 // pred_check_branch
      %535 = sbr.rel (%p533) target = $region40
    $region39: #{_lambda_.2} parent=5 // pred_region
      %s536 = ssub.s32 %s9, 2
      // Predicated region
      $region41: #{_lambda_.2} parent=39 // pred_check
        %p537 = pneg %p106
      $region42: #{_lambda_.2} parent=39 // pred_check_branch
        %539 = sbr.rel (%p537) target = $region44
      $region43: #{_lambda_.2} parent=39 // pred_region
        %s540 = smul.u32 2, %s15
        %p541 = scmp.lt.s32.totalorder %s540, 25
        %s542 = scalar_select %p541, %s540, 25
        %s543 = smul.addr %s542, 4
        %s544 = scalar_lea.vmem %s3, %s543
      $region44: #{_lambda_.2} parent=39 // pred_fallthru
        _
    $region40: #{_lambda_.2} parent=5 // pred_fallthru
      _
  $region6: #{_lambda_.2} parent=0 // loop_footer
    %s13 = sadd.s32 1, %s9
  $region7: #{_lambda_.2} parent=0 // loop_footer_branch
    %8 = sbr.rel target = $region3
  $region8: #{_lambda_.2} parent=0 // loop_exit
    _

// kernel: _lambda_.3
$region0: #{_lambda_.3}
  #allocation0 [shape = 'u32[]', space=smem, size = 0x4, offset = 0x4, fixed_abs, tag = 'smem constant byte address 0x4 - core index']
  #allocation1 [shape = 'u32[144,128]{1,0:T(1,128)}', space=vmem, size = 0x12000, scoped, tag = 'internal scratch']
  %s0 = inlined_call_operand.vmem [shape: bf16[208,880], index: 0, kind: input, shape index: {}]
  %s1 = inlined_call_operand.vmem [shape: bf16[880,32], index: 1, kind: input, shape index: {}]
  %s2 = inlined_call_operand.vmem [shape: f32[1,32], index: 2, kind: input, shape index: {}]
  %s3 = inlined_call_operand.vmem [shape: f32[208,32], index: 3, kind: output, shape index: {}]
  %s4 = sld [smem:[#allocation0]]
  $region45: #{_lambda_.3} parent=0
    _
  %s6 = ssub.s32 1, %s4
  %s7 = scalar_select 0, %s6, %s4
  loop: start=0, step=1, limit=15
  $region2: #{_lambda_.3} parent=0 // loop_pre_header
    _
  $region3: #{_lambda_.3} parent=0 // loop_header
    %s9 = sphi 0, %s13
    %p10 = scmp.ge.s32.totalorder %s9, 15
    %s19 = sphi 0, %s21
    %s22 = sphi 0, %s19
    %s23 = sphi 0, %s22
    %s39 = sphi 0, %s23
    %s43 = sphi 0, %s43
    %s45 = sphi 0, %s43
    %s46 = sphi 0, %s45
    %s60 = sphi 0, %s46
    %s64 = sphi 0, %s64
    %s66 = sphi 0, %s64
    %s67 = sphi 0, %s66
    %s81 = sphi 0, %s67
    %s87 = sphi 0, %s89
    %s90 = sphi 0, %s87
    %s91 = sphi 0, %s90
    %s107 = sphi 0, %s91
  $region4: #{_lambda_.3} parent=0 // loop_header_branch
    %12 = sbr.rel (%p10) target = $region8
  $region5: #{_lambda_.3} parent=0 // loop_body
    %s14 = ssub.s32 %s9, 1
    %s15 = ssub.s32 %s9, 2
    %s16 = sadd.s32 %s9, 1
    %s17 = ssub.s32 %s9, %s16
    %p18 = scmp.eq.s32.totalorder %s17, 0
    %s20 = sadd.s32 %s19, 1
    %s21 = scalar_select %p18, %s19, %s20
    %p24 = pneg %p18
    %p25 = scmp.eq.s32.totalorder %s9, 12
    %p26 = por %p24, %p25
    %p27 = scmp.ne.s32.totalorder %s19, %s22
    %p28 = scmp.eq.s32.totalorder %s9, 0
    %p29 = por %p27, %p28
    %p30 = scmp.ne.s32.totalorder %s19, %s22
    %p31 = scmp.eq.s32.totalorder %s14, 12
    %p32 = por %p30, %p31
    %p33 = scmp.ne.s32.totalorder %s22, %s23
    %p34 = scmp.eq.s32.totalorder %s14, 0
    %p35 = por %p33, %p34
    %p36 = scmp.ne.s32.totalorder %s22, %s23
    %p37 = scmp.eq.s32.totalorder %s15, 12
    %p38 = por %p36, %p37
    %p40 = scmp.ne.s32.totalorder %s23, %s39
    %p41 = scmp.eq.s32.totalorder %s15, 0
    %p42 = por %p40, %p41
    %s44 = sadd.s32 %s43, 1
    %p47 = scmp.eq.s32.totalorder %s9, 12
    %p48 = scmp.ne.s32.totalorder %s43, %s45
    %p49 = scmp.eq.s32.totalorder %s9, 0
    %p50 = por %p48, %p49
    %p51 = scmp.ne.s32.totalorder %s43, %s45
    %p52 = scmp.eq.s32.totalorder %s14, 12
    %p53 = por %p51, %p52
    %p54 = scmp.ne.s32.totalorder %s45, %s46
    %p55 = scmp.eq.s32.totalorder %s14, 0
    %p56 = por %p54, %p55
    %p57 = scmp.ne.s32.totalorder %s45, %s46
    %p58 = scmp.eq.s32.totalorder %s15, 12
    %p59 = por %p57, %p58
    %p61 = scmp.ne.s32.totalorder %s46, %s60
    %p62 = scmp.eq.s32.totalorder %s15, 0
    %p63 = por %p61, %p62
    %s65 = sadd.s32 %s64, 1
    %p68 = scmp.eq.s32.totalorder %s9, 12
    %p69 = scmp.ne.s32.totalorder %s64, %s66
    %p70 = scmp.eq.s32.totalorder %s9, 0
    %p71 = por %p69, %p70
    %p72 = scmp.ne.s32.totalorder %s64, %s66
    %p73 = scmp.eq.s32.totalorder %s14, 12
    %p74 = por %p72, %p73
    %p75 = scmp.ne.s32.totalorder %s66, %s67
    %p76 = scmp.eq.s32.totalorder %s14, 0
    %p77 = por %p75, %p76
    %p78 = scmp.ne.s32.totalorder %s66, %s67
    %p79 = scmp.eq.s32.totalorder %s15, 12
    %p80 = por %p78, %p79
    %p82 = scmp.ne.s32.totalorder %s67, %s81
    %p83 = scmp.eq.s32.totalorder %s15, 0
    %p84 = por %p82, %p83
    %s85 = ssub.s32 %s9, %s16
    %p86 = scmp.eq.s32.totalorder %s85, 0
    %s88 = sadd.s32 %s87, 1
    %s89 = scalar_select %p86, %s87, %s88
    %p92 = pneg %p86
    %p93 = scmp.eq.s32.totalorder %s9, 12
    %p94 = por %p92, %p93
    %p95 = scmp.ne.s32.totalorder %s87, %s90
    %p96 = scmp.eq.s32.totalorder %s9, 0
    %p97 = por %p95, %p96
    %p98 = scmp.ne.s32.totalorder %s87, %s90
    %p99 = scmp.eq.s32.totalorder %s14, 12
    %p100 = por %p98, %p99
    %p101 = scmp.ne.s32.totalorder %s90, %s91
    %p102 = scmp.eq.s32.totalorder %s14, 0
    %p103 = por %p101, %p102
    %p104 = scmp.ne.s32.totalorder %s90, %s91
    %p105 = scmp.eq.s32.totalorder %s15, 12
    %p106 = por %p104, %p105
    %p108 = scmp.ne.s32.totalorder %s91, %s107
    %p109 = scmp.eq.s32.totalorder %s15, 0
    %p110 = por %p108, %p109
    %p111 = scmp.le.s32.totalorder 1, %s9
    %p112 = scmp.lt.s32.totalorder %s9, 14
    %p113 = pnand %p111, %p112
    %p114 = pneg %p113
    // Predicated region
    $region9: #{_lambda_.3} parent=5 // pred_check
      _
    $region10: #{_lambda_.3} parent=5 // pred_check_branch
      %116 = sbr.rel (%p113) target = $region12
    $region11: #{_lambda_.3} parent=5 // pred_region
      %s117 = ssub.s32 %s9, 1
      // Predicated region
      $region13: #{_lambda_.3} parent=11 // pred_check
        %p118 = pneg %p56
      $region14: #{_lambda_.3} parent=11 // pred_check_branch
        %120 = sbr.rel (%p118) target = $region16
      $region15: #{_lambda_.3} parent=11 // pred_region
        _
      $region16: #{_lambda_.3} parent=11 // pred_fallthru
        _
      // Predicated region
      $region17: #{_lambda_.3} parent=11 // pred_check
        %p121 = pneg %p77
      $region18: #{_lambda_.3} parent=11 // pred_check_branch
        %123 = sbr.rel (%p121) target = $region20
      $region19: #{_lambda_.3} parent=11 // pred_region
        _
      $region20: #{_lambda_.3} parent=11 // pred_fallthru
        _
    $region12: #{_lambda_.3} parent=5 // pred_fallthru
      _
    %p124 = scmp.lt.s32.totalorder %s9, 13
    // Predicated region
    $region21: #{_lambda_.3} parent=5 // pred_check
      %p125 = pneg %p124
    $region22: #{_lambda_.3} parent=5 // pred_check_branch
      %127 = sbr.rel (%p125) target = $region24
    $region23: #{_lambda_.3} parent=5 // pred_region
      // Predicated region
      $region25: #{_lambda_.3} parent=23 // pred_check
        %p128 = pneg %p29
      $region26: #{_lambda_.3} parent=23 // pred_check_branch
        %130 = sbr.rel (%p128) target = $region28
      $region27: #{_lambda_.3} parent=23 // pred_region
        %s131 = smul.u32 2, %s9
        %p132 = scmp.lt.s32.totalorder %s131, 25
        %s133 = scalar_select %p132, %s131, 25
        %s134 = smul.addr %s133, 7
        %s135 = smul.addr %s134, 4
        %s136 = scalar_lea.vmem %s0, %s135
        %s137 = smul.u32 2, %s9
      $region28: #{_lambda_.3} parent=23 // pred_fallthru
        _
    $region24: #{_lambda_.3} parent=5 // pred_fallthru
      _
    %p138 = scmp.le.s32.totalorder 1, %s9
    %p139 = scmp.lt.s32.totalorder %s9, 14
    %p140 = pnand %p138, %p139
    %p141 = pneg %p140
    // Predicated region
    $region29: #{_lambda_.3} parent=5 // pred_check
      _
    $region30: #{_lambda_.3} parent=5 // pred_check_branch
      %143 = sbr.rel (%p140) target = $region32
    $region31: #{_lambda_.3} parent=5 // pred_region
      %s144 = ssub.s32 %s9, 1
      %s145 = smul.u32 2, %s14
      %p146 = scmp.lt.s32.totalorder %s145, 25
      %s147 = scalar_select %p146, %s145, 25
      %s148 = smul.addr %s147, 7
      %s149 = smul.addr %s148, 4
      %s150 = scalar_lea.vmem %s0, %s149
      %p151 = pneg %p35
      %p152 = pneg %p32
      %p153 = pneg %p56
      %p154 = pneg %p53
      %p155 = pneg %p77
      %p156 = pneg %p74
      %p157 = pneg %p103
      %p158 = pneg %p100
      %s159 = smul.u32 2, %s14
      %p160 = scmp.lt.s32.totalorder %s159, 25
      %s161 = scalar_select %p160, %s159, 25
      %s162 = smul.addr %s161, 8
      %s163 = scalar_lea.vmem %s3, %s162
      %s164 = smul.u32 2, %s14
      %p165 = scmp.lt.s32.totalorder %s164, 25
      %s166 = scalar_select %p165, %s164, 25
      %s167 = smul.addr %s166, 7
      %s168 = smul.addr %s167, 4
      %s169 = scalar_lea.vmem %s0, %s168
      %s170 = smul.u32 2, %s14
      %s171 = smul.u32 2, %s14
      %p172 = scmp.lt.s32.totalorder %s171, 25
      %s173 = scalar_select %p172, %s171, 25
      %s174 = smul.addr %s173, 8
      %s175 = scalar_lea.vmem %s3, %s174
      %s176 = smul.u32 2, %s14
      %v178 = vld [vmem:[%s169] sm:$0xff]
      %v179 = vld [vmem:[%s169 + $0x8] sm:$0xff]
      %v180 = vld [vmem:[%s169 + $0x10] sm:$0xff]
      %v181 = vld [vmem:[%s169 + $0x18] sm:$0xf]
      %v182 = vld [vmem:[%s169 + $0x1c] sm:$0xff]
      %v183 = vld [vmem:[%s169 + $0x24] sm:$0xff]
      %v184 = vld [vmem:[%s169 + $0x2c] sm:$0xff]
      %v185 = vld [vmem:[%s169 + $0x34] sm:$0xf]
      %v186 = vld [vmem:[%s1] sm:$0xf]
      %v187 = vld [vmem:[%s1 + $0x4] sm:$0xf]
      %v188 = vld [vmem:[%s1 + $0x8] sm:$0xf]
      %v189 = vld [vmem:[%s1 + $0xc] sm:$0xf]
      %v190 = vld [vmem:[%s1 + $0x10] sm:$0xf]
      %v191 = vld [vmem:[%s1 + $0x14] sm:$0xf]
      %v192 = vld [vmem:[%s1 + $0x18] sm:$0xf]
      %v193 = vld [vmem:[%s1 + $0x1c] sm:$0xf]
      %v194 = vld [vmem:[%s1 + $0x20] sm:$0xf]
      %v195 = vld [vmem:[%s1 + $0x24] sm:$0xf]
      %v196 = vld [vmem:[%s1 + $0x28] sm:$0xf]
      %v197 = vld [vmem:[%s1 + $0x2c] sm:$0xf]
      %v198 = vld [vmem:[%s1 + $0x30] sm:$0xf]
      %v199 = vld [vmem:[%s1 + $0x34] sm:$0xf]
      %v200 = vld [vmem:[%s1 + $0x38] sm:$0xf]
      %v201 = vld [vmem:[%s1 + $0x3c] sm:$0xf]
      %v202 = vld [vmem:[%s1 + $0x40] sm:$0xf]
      %v203 = vld [vmem:[%s1 + $0x44] sm:$0xf]
      %v204 = vld [vmem:[%s1 + $0x48] sm:$0xf]
      %v205 = vld [vmem:[%s1 + $0x4c] sm:$0xf]
      %v206 = vld [vmem:[%s1 + $0x50] sm:$0xf]
      %v207 = vld [vmem:[%s1 + $0x54] sm:$0xf]
      %v208 = vld [vmem:[%s1 + $0x58] sm:$0xf]
      %v209 = vld [vmem:[%s1 + $0x5c] sm:$0xf]
      %v210 = vld [vmem:[%s1 + $0x60] sm:$0xf]
      %v211 = vld [vmem:[%s1 + $0x64] sm:$0xf]
      %v212 = vld [vmem:[%s1 + $0x68] sm:$0xf]
      %v213 = vld [vmem:[%s1 + $0x6c] sm:$0xf]
      %v214 = vld [vmem:[%s1 + $0x70] sm:$0xf]
      %v215 = vld [vmem:[%s1 + $0x74] sm:$0xf]
      %v216 = vld [vmem:[%s1 + $0x78] sm:$0xf]
      %v217 = vld [vmem:[%s1 + $0x7c] sm:$0xf]
      %v218 = vld [vmem:[%s1 + $0x80] sm:$0xf]
      %v219 = vld [vmem:[%s1 + $0x84] sm:$0xf]
      %v220 = vld [vmem:[%s1 + $0x88] sm:$0xf]
      %v221 = vld [vmem:[%s1 + $0x8c] sm:$0xf]
      %v222 = vld [vmem:[%s1 + $0x90] sm:$0xf]
      %v223 = vld [vmem:[%s1 + $0x94] sm:$0xf]
      %v224 = vld [vmem:[%s1 + $0x98] sm:$0xf]
      %v225 = vld [vmem:[%s1 + $0x9c] sm:$0xf]
      %v226 = vld [vmem:[%s1 + $0xa0] sm:$0xf]
      %v227 = vld [vmem:[%s1 + $0xa4] sm:$0xf]
      %v228 = vld [vmem:[%s1 + $0xa8] sm:$0xf]
      %v229 = vld [vmem:[%s1 + $0xac] sm:$0xf]
      %v230 = vld [vmem:[%s1 + $0xb0] sm:$0xf]
      %v231 = vld [vmem:[%s1 + $0xb4] sm:$0xf]
      %v232 = vld [vmem:[%s1 + $0xb8] sm:$0xf]
      %v233 = vld [vmem:[%s1 + $0xbc] sm:$0xf]
      %v234 = vld [vmem:[%s1 + $0xc0] sm:$0xf]
      %v235 = vld [vmem:[%s1 + $0xc4] sm:$0xf]
      %v236 = vld [vmem:[%s1 + $0xc8] sm:$0xf]
      %v237 = vld [vmem:[%s1 + $0xcc] sm:$0xf]
      %v238 = vld [vmem:[%s1 + $0xd0] sm:$0xf]
      %v239 = vld [vmem:[%s1 + $0xd4] sm:$0xf]
      %v240 = vld [vmem:[%s1 + $0xd8] sm:$0xf]
      %v241 = vld [vmem:[%s1 + $0xdc] sm:$0xf]
      %v242 = vld [vmem:[%s1 + $0xe0] sm:$0xf]
      %v243 = vld [vmem:[%s1 + $0xe4] sm:$0xf]
      %v244 = vld [vmem:[%s1 + $0xe8] sm:$0xf]
      %v245 = vld [vmem:[%s1 + $0xec] sm:$0xf]
      %v246 = vld [vmem:[%s1 + $0xf0] sm:$0xf]
      %v247 = vld [vmem:[%s1 + $0xf4] sm:$0xf]
      %v248 = vld [vmem:[%s1 + $0xf8] sm:$0xf]
      %v249 = vld [vmem:[%s1 + $0xfc] sm:$0xf]
      %v250 = vld [vmem:[%s1 + $0x100] sm:$0xf]
      %v251 = vld [vmem:[%s1 + $0x104] sm:$0xf]
      %v252 = vld [vmem:[%s1 + $0x108] sm:$0xf]
      %v253 = vld [vmem:[%s1 + $0x10c] sm:$0xf]
      %v254 = vld [vmem:[%s1 + $0x110] sm:$0xf]
      %v255 = vld [vmem:[%s1 + $0x114] sm:$0xf]
      %v256 = vld [vmem:[%s1 + $0x118] sm:$0xf]
      %v257 = vld [vmem:[%s1 + $0x11c] sm:$0xf]
      %v258 = vld [vmem:[%s1 + $0x120] sm:$0xf]
      %v259 = vld [vmem:[%s1 + $0x124] sm:$0xf]
      %v260 = vld [vmem:[%s1 + $0x128] sm:$0xf]
      %v261 = vld [vmem:[%s1 + $0x12c] sm:$0xf]
      %v262 = vld [vmem:[%s1 + $0x130] sm:$0xf]
      %v263 = vld [vmem:[%s1 + $0x134] sm:$0xf]
      %v264 = vld [vmem:[%s1 + $0x138] sm:$0xf]
      %v265 = vld [vmem:[%s1 + $0x13c] sm:$0xf]
      %v266 = vld [vmem:[%s1 + $0x140] sm:$0xf]
      %v267 = vld [vmem:[%s1 + $0x144] sm:$0xf]
      %v268 = vld [vmem:[%s1 + $0x148] sm:$0xf]
      %v269 = vld [vmem:[%s1 + $0x14c] sm:$0xf]
      %v270 = vld [vmem:[%s1 + $0x150] sm:$0xf]
      %v271 = vld [vmem:[%s1 + $0x154] sm:$0xf]
      %v272 = vld [vmem:[%s1 + $0x158] sm:$0xf]
      %v273 = vld [vmem:[%s1 + $0x15c] sm:$0xf]
      %v274 = vld [vmem:[%s1 + $0x160] sm:$0xf]
      %v275 = vld [vmem:[%s1 + $0x164] sm:$0xf]
      %v276 = vld [vmem:[%s1 + $0x168] sm:$0xf]
      %v277 = vld [vmem:[%s1 + $0x16c] sm:$0xf]
      %v278 = vld [vmem:[%s1 + $0x170] sm:$0xf]
      %v279 = vld [vmem:[%s1 + $0x174] sm:$0xf]
      %v280 = vld [vmem:[%s1 + $0x178] sm:$0xf]
      %v281 = vld [vmem:[%s1 + $0x17c] sm:$0xf]
      %v282 = vld [vmem:[%s1 + $0x180] sm:$0xf]
      %v283 = vld [vmem:[%s1 + $0x184] sm:$0xf]
      %v284 = vld [vmem:[%s1 + $0x188] sm:$0xf]
      %v285 = vld [vmem:[%s1 + $0x18c] sm:$0xf]
      %v286 = vld [vmem:[%s1 + $0x190] sm:$0xf]
      %v287 = vld [vmem:[%s1 + $0x194] sm:$0xf]
      %v288 = vld [vmem:[%s1 + $0x198] sm:$0xf]
      %v289 = vld [vmem:[%s1 + $0x19c] sm:$0xf]
      %v290 = vld [vmem:[%s1 + $0x1a0] sm:$0xf]
      %v291 = vld [vmem:[%s1 + $0x1a4] sm:$0xf]
      %v292 = vld [vmem:[%s1 + $0x1a8] sm:$0xf]
      %v293 = vld [vmem:[%s1 + $0x1ac] sm:$0xf]
      %v294 = vld [vmem:[%s1 + $0x1b0] sm:$0xf]
      %v295 = vld [vmem:[%s1 + $0x1b4] sm:$0xf]
      %v296 = vld [vmem:[%s2] sm:$0x1]
      %v298 = vlaneseq
      %v299 = vshrl.u32 %v298, 7
      %v300 = vsub.s32 0, %v299
      %v301 = vrot.slane %v296, %v300
      %v311 = vunpack.c.l.b16 %v178
      %v312 = vunpack.c.h.b16 %v178
      %v313 = vunpack.c.l.b16 %v179
      %v314 = vunpack.c.h.b16 %v179
      %v315 = vunpack.c.l.b16 %v180
      %v316 = vunpack.c.h.b16 %v180
      %v317 = vunpack.c.l.b16 %v181
      %v318 = vunpack.c.l.b16 %v182
      %v319 = vunpack.c.h.b16 %v182
      %v320 = vunpack.c.l.b16 %v183
      %v321 = vunpack.c.h.b16 %v183
      %v322 = vunpack.c.l.b16 %v184
      %v323 = vunpack.c.h.b16 %v184
      %v324 = vunpack.c.l.b16 %v185
      %v325 = vpack.c.b16 %v318, %v311
      %v326 = vpack.c.b16 %v319, %v312
      %v327 = vpack.c.b16 %v320, %v313
      %v328 = vpack.c.b16 %v321, %v314
      %v329 = vpack.c.b16 %v322, %v315
      %v330 = vpack.c.b16 %v323, %v316
      %v331 = vpack.c.b16 %v324, %v317
      %v448 = vunpack.c.l.b16 %v186
      %v449 = vunpack.c.l.b16 %v187
      %v450 = vunpack.c.l.b16 %v188
      %v451 = vunpack.c.l.b16 %v189
      %v452 = vunpack.c.l.b16 %v190
      %v453 = vunpack.c.l.b16 %v191
      %v454 = vunpack.c.l.b16 %v192
      %v455 = vunpack.c.l.b16 %v193
      %v456 = vunpack.c.l.b16 %v194
      %v457 = vunpack.c.l.b16 %v195
      %v458 = vunpack.c.l.b16 %v196
      %v459 = vunpack.c.l.b16 %v197
      %v460 = vunpack.c.l.b16 %v198
      %v461 = vunpack.c.l.b16 %v199
      %v462 = vunpack.c.l.b16 %v200
      %v463 = vunpack.c.l.b16 %v201
      %v464 = vunpack.c.l.b16 %v202
      %v465 = vunpack.c.l.b16 %v203
      %v466 = vunpack.c.l.b16 %v204
      %v467 = vunpack.c.l.b16 %v205
      %v468 = vunpack.c.l.b16 %v206
      %v469 = vunpack.c.l.b16 %v207
      %v470 = vunpack.c.l.b16 %v208
      %v471 = vunpack.c.l.b16 %v209
      %v472 = vunpack.c.l.b16 %v210
      %v473 = vunpack.c.l.b16 %v211
      %v474 = vunpack.c.l.b16 %v212
      %v475 = vunpack.c.l.b16 %v213
      %v476 = vunpack.c.l.b16 %v214
      %v477 = vunpack.c.l.b16 %v215
      %v478 = vunpack.c.l.b16 %v216
      %v479 = vunpack.c.l.b16 %v217
      %v480 = vunpack.c.l.b16 %v218
      %v481 = vunpack.c.l.b16 %v219
      %v482 = vunpack.c.l.b16 %v220
      %v483 = vunpack.c.l.b16 %v221
      %v484 = vunpack.c.l.b16 %v222
      %v485 = vunpack.c.l.b16 %v223
      %v486 = vunpack.c.l.b16 %v224
      %v487 = vunpack.c.l.b16 %v225
      %v488 = vunpack.c.l.b16 %v226
      %v489 = vunpack.c.l.b16 %v227
      %v490 = vunpack.c.l.b16 %v228
      %v491 = vunpack.c.l.b16 %v229
      %v492 = vunpack.c.l.b16 %v230
      %v493 = vunpack.c.l.b16 %v231
      %v494 = vunpack.c.l.b16 %v232
      %v495 = vunpack.c.l.b16 %v233
      %v496 = vunpack.c.l.b16 %v234
      %v497 = vunpack.c.l.b16 %v235
      %v498 = vunpack.c.l.b16 %v236
      %v499 = vunpack.c.l.b16 %v237
      %v500 = vunpack.c.l.b16 %v238
      %v501 = vunpack.c.l.b16 %v239
      %v502 = vunpack.c.l.b16 %v240
      %v503 = vunpack.c.l.b16 %v241
      %v504 = vunpack.c.l.b16 %v242
      %v505 = vunpack.c.l.b16 %v243
      %v506 = vunpack.c.l.b16 %v244
      %v507 = vunpack.c.l.b16 %v245
      %v508 = vunpack.c.l.b16 %v246
      %v509 = vunpack.c.l.b16 %v247
      %v510 = vunpack.c.l.b16 %v248
      %v511 = vunpack.c.l.b16 %v249
      %v512 = vunpack.c.l.b16 %v250
      %v513 = vunpack.c.l.b16 %v251
      %v514 = vunpack.c.l.b16 %v252
      %v515 = vunpack.c.l.b16 %v253
      %v516 = vunpack.c.l.b16 %v254
      %v517 = vunpack.c.l.b16 %v255
      %v518 = vunpack.c.l.b16 %v256
      %v519 = vunpack.c.l.b16 %v257
      %v520 = vunpack.c.l.b16 %v258
      %v521 = vunpack.c.l.b16 %v259
      %v522 = vunpack.c.l.b16 %v260
      %v523 = vunpack.c.l.b16 %v261
      %v524 = vunpack.c.l.b16 %v262
      %v525 = vunpack.c.l.b16 %v263
      %v526 = vunpack.c.l.b16 %v264
      %v527 = vunpack.c.l.b16 %v265
      %v528 = vunpack.c.l.b16 %v266
      %v529 = vunpack.c.l.b16 %v267
      %v530 = vunpack.c.l.b16 %v268
      %v531 = vunpack.c.l.b16 %v269
      %v532 = vunpack.c.l.b16 %v270
      %v533 = vunpack.c.l.b16 %v271
      %v534 = vunpack.c.l.b16 %v272
      %v535 = vunpack.c.l.b16 %v273
      %v536 = vunpack.c.l.b16 %v274
      %v537 = vunpack.c.l.b16 %v275
      %v538 = vunpack.c.l.b16 %v276
      %v539 = vunpack.c.l.b16 %v277
      %v540 = vunpack.c.l.b16 %v278
      %v541 = vunpack.c.l.b16 %v279
      %v542 = vunpack.c.l.b16 %v280
      %v543 = vunpack.c.l.b16 %v281
      %v544 = vunpack.c.l.b16 %v282
      %v545 = vunpack.c.l.b16 %v283
      %v546 = vunpack.c.l.b16 %v284
      %v547 = vunpack.c.l.b16 %v285
      %v548 = vunpack.c.l.b16 %v286
      %v549 = vunpack.c.l.b16 %v287
      %v550 = vunpack.c.l.b16 %v288
      %v551 = vunpack.c.l.b16 %v289
      %v552 = vunpack.c.l.b16 %v290
      %v553 = vunpack.c.l.b16 %v291
      %v554 = vunpack.c.l.b16 %v292
      %v555 = vunpack.c.l.b16 %v293
      %v556 = vunpack.c.l.b16 %v294
      %v557 = vunpack.c.l.b16 %v295
      %v558 = vpack.c.b16 %v449, %v448
      %v559 = vpack.c.b16 %v451, %v450
      %v560 = vpack.c.b16 %v453, %v452
      %v561 = vpack.c.b16 %v455, %v454
      %v562 = vpack.c.b16 %v457, %v456
      %v563 = vpack.c.b16 %v459, %v458
      %v564 = vpack.c.b16 %v461, %v460
      %v565 = vpack.c.b16 %v463, %v462
      %v566 = vpack.c.b16 %v465, %v464
      %v567 = vpack.c.b16 %v467, %v466
      %v568 = vpack.c.b16 %v469, %v468
      %v569 = vpack.c.b16 %v471, %v470
      %v570 = vpack.c.b16 %v473, %v472
      %v571 = vpack.c.b16 %v475, %v474
      %v572 = vpack.c.b16 %v477, %v476
      %v573 = vpack.c.b16 %v479, %v478
      %v574 = vpack.c.b16 %v481, %v480
      %v575 = vpack.c.b16 %v483, %v482
      %v576 = vpack.c.b16 %v485, %v484
      %v577 = vpack.c.b16 %v487, %v486
      %v578 = vpack.c.b16 %v489, %v488
      %v579 = vpack.c.b16 %v491, %v490
      %v580 = vpack.c.b16 %v493, %v492
      %v581 = vpack.c.b16 %v495, %v494
      %v582 = vpack.c.b16 %v497, %v496
      %v583 = vpack.c.b16 %v499, %v498
      %v584 = vpack.c.b16 %v501, %v500
      %v585 = vpack.c.b16 %v503, %v502
      %v586 = vpack.c.b16 %v505, %v504
      %v587 = vpack.c.b16 %v507, %v506
      %v588 = vpack.c.b16 %v509, %v508
      %v589 = vpack.c.b16 %v511, %v510
      %v590 = vpack.c.b16 %v513, %v512
      %v591 = vpack.c.b16 %v515, %v514
      %v592 = vpack.c.b16 %v517, %v516
      %v593 = vpack.c.b16 %v519, %v518
      %v594 = vpack.c.b16 %v521, %v520
      %v595 = vpack.c.b16 %v523, %v522
      %v596 = vpack.c.b16 %v525, %v524
      %v597 = vpack.c.b16 %v527, %v526
      %v598 = vpack.c.b16 %v529, %v528
      %v599 = vpack.c.b16 %v531, %v530
      %v600 = vpack.c.b16 %v533, %v532
      %v601 = vpack.c.b16 %v535, %v534
      %v602 = vpack.c.b16 %v537, %v536
      %v603 = vpack.c.b16 %v539, %v538
      %v604 = vpack.c.b16 %v541, %v540
      %v605 = vpack.c.b16 %v543, %v542
      %v606 = vpack.c.b16 %v545, %v544
      %v607 = vpack.c.b16 %v547, %v546
      %v608 = vpack.c.b16 %v549, %v548
      %v609 = vpack.c.b16 %v551, %v550
      %v610 = vpack.c.b16 %v553, %v552
      %v611 = vpack.c.b16 %v555, %v554
      %v612 = vpack.c.b16 %v557, %v556
      %vm668 = vcmask 916480
      %v670 = vsel %vm668, %v331, 0
      %672 = vmatprep.subr.bf16.mxu0 0
      %673 = vmatpush1.bf16.msra.mxu0 %v565
      %674 = vmatprep.subr.bf16.mxu0 0
      %675 = vmatpush1.bf16.msra.mxu0 %v564
      %676 = vmatprep.subr.bf16.mxu0 0
      %677 = vmatpush1.bf16.msra.mxu0 %v563
      %678 = vmatprep.subr.bf16.mxu0 0
      %679 = vmatpush1.bf16.msra.mxu0 %v562
      %680 = vmatprep.subr.bf16.mxu0 0
      %681 = vmatpush1.bf16.msra.mxu0 %v561
      %682 = vmatprep.subr.bf16.mxu0 0
      %683 = vmatpush1.bf16.msra.mxu0 %v560
      %684 = vmatprep.subr.bf16.mxu0 0
      %685 = vmatpush1.bf16.msra.mxu0 %v559
      %686 = vmatprep.subr.bf16.mxu0 0
      %687 = vmatpush1.bf16.msra.mxu0 %v558
      %688 = vmatprep.subr.bf16.mxu0 0
      %689 = vmatpush2.bf16.msra.mxu0 %v573
      %690 = vmatprep.subr.bf16.mxu0 0
      %691 = vmatpush2.bf16.msra.mxu0 %v572
      %692 = vmatprep.subr.bf16.mxu0 0
      %693 = vmatpush2.bf16.msra.mxu0 %v571
      %694 = vmatprep.subr.bf16.mxu0 0
      %695 = vmatpush2.bf16.msra.mxu0 %v570
      %696 = vmatprep.subr.bf16.mxu0 0
      %697 = vmatpush2.bf16.msra.mxu0 %v569
      %698 = vmatprep.subr.bf16.mxu0 0
      %699 = vmatpush2.bf16.msra.mxu0 %v568
      %700 = vmatprep.subr.bf16.mxu0 0
      %701 = vmatpush2.bf16.msra.mxu0 %v567
      %702 = vmatprep.subr.bf16.mxu0 0
      %703 = vmatpush2.bf16.msra.mxu0 %v566
      %704 = vmatprep.mubr.bf16.mxu0 %v326
      %705 = vmatmul.mubr.bf16.gmra.mxu0 %v325
      %v706 = vpop.f32.mrf.mxu0
      %v707 = vadd.f32 %v301, %v706
      %v708 = vpop.f32.mrf.mxu0
      %v709 = vpop.f32.mrf.mxu0
      %v710 = vadd.f32 %v301, %v709
      %v711 = vpop.f32.mrf.mxu0
      %712 = vdwg.mxu0
      %713 = vmatprep.subr.bf16.mxu0 0
      %714 = vmatpush1.bf16.msra.mxu0 %v581
      %715 = vmatprep.subr.bf16.mxu0 0
      %716 = vmatpush1.bf16.msra.mxu0 %v580
      %717 = vmatprep.subr.bf16.mxu0 0
      %718 = vmatpush1.bf16.msra.mxu0 %v579
      %719 = vmatprep.subr.bf16.mxu0 0
      %720 = vmatpush1.bf16.msra.mxu0 %v578
      %721 = vmatprep.subr.bf16.mxu0 0
      %722 = vmatpush1.bf16.msra.mxu0 %v577
      %723 = vmatprep.subr.bf16.mxu0 0
      %724 = vmatpush1.bf16.msra.mxu0 %v576
      %725 = vmatprep.subr.bf16.mxu0 0
      %726 = vmatpush1.bf16.msra.mxu0 %v575
      %727 = vmatprep.subr.bf16.mxu0 0
      %728 = vmatpush1.bf16.msra.mxu0 %v574
      %729 = vmatprep.subr.bf16.mxu0 0
      %730 = vmatpush2.bf16.msra.mxu0 %v589
      %731 = vmatprep.subr.bf16.mxu0 0
      %732 = vmatpush2.bf16.msra.mxu0 %v588
      %733 = vmatprep.subr.bf16.mxu0 0
      %734 = vmatpush2.bf16.msra.mxu0 %v587
      %735 = vmatprep.subr.bf16.mxu0 0
      %736 = vmatpush2.bf16.msra.mxu0 %v586
      %737 = vmatprep.subr.bf16.mxu0 0
      %738 = vmatpush2.bf16.msra.mxu0 %v585
      %739 = vmatprep.subr.bf16.mxu0 0
      %740 = vmatpush2.bf16.msra.mxu0 %v584
      %741 = vmatprep.subr.bf16.mxu0 0
      %742 = vmatpush2.bf16.msra.mxu0 %v583
      %743 = vmatprep.subr.bf16.mxu0 0
      %744 = vmatpush2.bf16.msra.mxu0 %v582
      %745 = vmatprep.mubr.bf16.mxu0 %v328
      %746 = vmatmul.mubr.bf16.gmra.mxu0 %v327
      %v747 = vpop.f32.mrf.mxu0
      %v748 = vadd.f32 %v707, %v747
      %v749 = vpop.f32.mrf.mxu0
      %v750 = vpop.f32.mrf.mxu0
      %v751 = vadd.f32 %v710, %v750
      %v752 = vpop.f32.mrf.mxu0
      %753 = vdwg.mxu0
      %754 = vmatprep.subr.bf16.mxu0 0
      %755 = vmatpush1.bf16.msra.mxu0 %v597
      %756 = vmatprep.subr.bf16.mxu0 0
      %757 = vmatpush1.bf16.msra.mxu0 %v596
      %758 = vmatprep.subr.bf16.mxu0 0
      %759 = vmatpush1.bf16.msra.mxu0 %v595
      %760 = vmatprep.subr.bf16.mxu0 0
      %761 = vmatpush1.bf16.msra.mxu0 %v594
      %762 = vmatprep.subr.bf16.mxu0 0
      %763 = vmatpush1.bf16.msra.mxu0 %v593
      %764 = vmatprep.subr.bf16.mxu0 0
      %765 = vmatpush1.bf16.msra.mxu0 %v592
      %766 = vmatprep.subr.bf16.mxu0 0
      %767 = vmatpush1.bf16.msra.mxu0 %v591
      %768 = vmatprep.subr.bf16.mxu0 0
      %769 = vmatpush1.bf16.msra.mxu0 %v590
      %770 = vmatprep.subr.bf16.mxu0 0
      %771 = vmatpush2.bf16.msra.mxu0 %v605
      %772 = vmatprep.subr.bf16.mxu0 0
      %773 = vmatpush2.bf16.msra.mxu0 %v604
      %774 = vmatprep.subr.bf16.mxu0 0
      %775 = vmatpush2.bf16.msra.mxu0 %v603
      %776 = vmatprep.subr.bf16.mxu0 0
      %777 = vmatpush2.bf16.msra.mxu0 %v602
      %778 = vmatprep.subr.bf16.mxu0 0
      %779 = vmatpush2.bf16.msra.mxu0 %v601
      %780 = vmatprep.subr.bf16.mxu0 0
      %781 = vmatpush2.bf16.msra.mxu0 %v600
      %782 = vmatprep.subr.bf16.mxu0 0
      %783 = vmatpush2.bf16.msra.mxu0 %v599
      %784 = vmatprep.subr.bf16.mxu0 0
      %785 = vmatpush2.bf16.msra.mxu0 %v598
      %786 = vmatprep.mubr.bf16.mxu0 %v330
      %787 = vmatmul.mubr.bf16.gmra.mxu0 %v329
      %v788 = vpop.f32.mrf.mxu0
      %v789 = vadd.f32 %v748, %v788
      %v790 = vpop.f32.mrf.mxu0
      %v791 = vpop.f32.mrf.mxu0
      %v792 = vadd.f32 %v751, %v791
      %v793 = vpop.f32.mrf.mxu0
      %794 = vdwg.mxu0
      %795 = vmatprep.subr.bf16.mxu0 0
      %796 = vmatpush1.bf16.msra.mxu0 0
      %797 = vmatprep.subr.bf16.mxu0 0
      %798 = vmatpush1.bf16.msra.mxu0 %v612
      %799 = vmatprep.subr.bf16.mxu0 0
      %800 = vmatpush1.bf16.msra.mxu0 %v611
      %801 = vmatprep.subr.bf16.mxu0 0
      %802 = vmatpush1.bf16.msra.mxu0 %v610
      %803 = vmatprep.subr.bf16.mxu0 0
      %804 = vmatpush1.bf16.msra.mxu0 %v609
      %805 = vmatprep.subr.bf16.mxu0 0
      %806 = vmatpush1.bf16.msra.mxu0 %v608
      %807 = vmatprep.subr.bf16.mxu0 0
      %808 = vmatpush1.bf16.msra.mxu0 %v607
      %809 = vmatprep.subr.bf16.mxu0 0
      %810 = vmatpush1.bf16.msra.mxu0 %v606
      %811 = vmatprep.subr.bf16.mxu0 0
      %812 = vmatpush2.bf16.msra.mxu0 0
      %813 = vmatprep.subr.bf16.mxu0 0
      %814 = vmatpush2.bf16.msra.mxu0 0
      %815 = vmatprep.subr.bf16.mxu0 0
      %816 = vmatpush2.bf16.msra.mxu0 0
      %817 = vmatprep.subr.bf16.mxu0 0
      %818 = vmatpush2.bf16.msra.mxu0 0
      %819 = vmatprep.subr.bf16.mxu0 0
      %820 = vmatpush2.bf16.msra.mxu0 0
      %821 = vmatprep.subr.bf16.mxu0 0
      %822 = vmatpush2.bf16.msra.mxu0 0
      %823 = vmatprep.subr.bf16.mxu0 0
      %824 = vmatpush2.bf16.msra.mxu0 0
      %825 = vmatprep.subr.bf16.mxu0 0
      %826 = vmatpush2.bf16.msra.mxu0 0
      %827 = vmatprep.mubr.bf16.mxu0 0
      %828 = vmatmul.mubr.bf16.gmra.mxu0 %v670
      %v829 = vpop.f32.mrf.mxu0
      %v830 = vadd.f32 %v789, %v829
      %v831 = vpop.f32.mrf.mxu0
      %v832 = vpop.f32.mrf.mxu0
      %v833 = vadd.f32 %v792, %v832
      %v834 = vpop.f32.mrf.mxu0
      %835 = vdwg.mxu0
      %v836 = vmax.f32 %v830, 0.0
      %v837 = vmax.f32 %v833, 0.0
      %vm838 = vcmask 261120
      %839 = vst.msk [vmem:[%s175] sm:$0xff] %vm838, %v836
      %840 = vst.msk [vmem:[%s175 + $0x8] sm:$0xff] %vm838, %v837
      %s841 = smul.u32 2, %s14
      %p842 = scmp.lt.s32.totalorder %s841, 25
      %s843 = scalar_select %p842, %s841, 25
      %s844 = smul.addr %s843, 8
      %s845 = scalar_lea.vmem %s3, %s844
      // Predicated region
      $region33: #{_lambda_.3} parent=31 // pred_check
        %p846 = pneg %p100
      $region34: #{_lambda_.3} parent=31 // pred_check_branch
        %848 = sbr.rel (%p846) target = $region36
      $region35: #{_lambda_.3} parent=31 // pred_region
        %s849 = smul.u32 2, %s14
      $region36: #{_lambda_.3} parent=31 // pred_fallthru
        _
    $region32: #{_lambda_.3} parent=5 // pred_fallthru
      _
    %p850 = scmp.le.s32.totalorder 2, %s9
    // Predicated region
    $region37: #{_lambda_.3} parent=5 // pred_check
      %p851 = pneg %p850
    $region38: #{_lambda_.3} parent=5 // pred_check_branch
      %853 = sbr.rel (%p851) target = $region40
    $region39: #{_lambda_.3} parent=5 // pred_region
      %s854 = ssub.s32 %s9, 2
      // Predicated region
      $region41: #{_lambda_.3} parent=39 // pred_check
        %p855 = pneg %p106
      $region42: #{_lambda_.3} parent=39 // pred_check_branch
        %857 = sbr.rel (%p855) target = $region44
      $region43: #{_lambda_.3} parent=39 // pred_region
        %s858 = smul.u32 2, %s15
        %p859 = scmp.lt.s32.totalorder %s858, 25
        %s860 = scalar_select %p859, %s858, 25
        %s861 = smul.addr %s860, 8
        %s862 = scalar_lea.vmem %s3, %s861
      $region44: #{_lambda_.3} parent=39 // pred_fallthru
        _
    $region40: #{_lambda_.3} parent=5 // pred_fallthru
      _
  $region6: #{_lambda_.3} parent=0 // loop_footer
    %s13 = sadd.s32 1, %s9
  $region7: #{_lambda_.3} parent=0 // loop_footer_branch
    %8 = sbr.rel target = $region3
  $region8: #{_lambda_.3} parent=0 // loop_exit
    _

</llo_original>
